<compile_context>
chip_gen: v7x
topology: tpu7x:2x2x1
jax: 0.10.0
libtpu: 0.0.40
codegen_flags: <defaults>
</compile_context>

<pallas_src>
import jax
import jax.numpy as jnp
from jax.experimental import pallas as pl
from jax.experimental.pallas import tpu as pltpu


_ONE_SIXTH = 1.0 / 6.0
_TB_CAP = 64  # bound the unrolled gate gather/scatter code size


def _round_up(x, m):
    return (x + m - 1) // m * m


def _divisors(n):
    return [d for d in range(1, n + 1) if n % d == 0]


def _budget():
    """Per-step block budget and scoped-VMEM limit, chip aware (safe default = v7x)."""
    block_bytes = 6 * 1024 * 1024       # fits v7x: 2*(in+out)*6 MiB = 24 MiB << 64 MiB
    vmem_limit = 48 * 1024 * 1024
    try:
        vmem = pltpu.get_tpu_info().vmem_capacity_bytes
        if vmem is not None and vmem >= 100 * 1024 * 1024:   # v5e / v6e (128 MiB VMEM)
            block_bytes = 8 * 1024 * 1024
            vmem_limit = 64 * 1024 * 1024
    except Exception:
        pass
    return block_bytes, vmem_limit


def _se_kernel(x_ref, w1_ref, b1_ref, w2_ref, b2_ref, o_ref):
    tb = x_ref.shape[0]
    x = x_ref[...]                                                   # (tb, C, HW)

    # AdaptiveAvgPool2d(1): lane-axis (HW) mean per (batch, channel), f32 accumulate.
    pooled = jnp.mean(x, axis=-1, keepdims=True, dtype=jnp.float32)  # (tb, C, 1)

    # Pack the tb pooled columns along lanes -> (C, tb).  C stays on sublanes, so the
    # gate math never forces a lane<->sublane relayout of the big activation block.
    p_ct = jnp.concatenate([pooled[b] for b in range(tb)], axis=1)   # (C, tb)

    # conv1 (1x1) + ReLU, batched over tb batch elements in one matmul.
    h = jnp.dot(w1_ref[...], p_ct, preferred_element_type=jnp.float32) + b1_ref[...]
    h = jnp.maximum(h, 0.0)                                          # (Cr, tb)

    # conv2 (1x1) + Hardsigmoid: clip(x/6 + 0.5, 0, 1)  (multiply, no divide).
    s = jnp.dot(w2_ref[...], h, preferred_element_type=jnp.float32) + b2_ref[...]
    s = jnp.clip(s * _ONE_SIXTH + 0.5, 0.0, 1.0)                     # (C, tb)

    # Per-batch gate columns back to (tb, C, 1): static lane slice + leading-dim stack
    # (both layout-trivial), then ONE fused lane-broadcast scale + slab store.
    s3 = jnp.concatenate([s[:, b:b + 1][None] for b in range(tb)], axis=0)  # (tb, C, 1)
    o_ref[...] = (x * s3.astype(x.dtype)).astype(o_ref.dtype)


def se_module(x, w1, b1, w2, b2):
    """SEModule forward.

    x:  (N, C, H, W) NCHW activations.
    w1: (Cr, C)  conv1 1x1 weight (squeezed), b1: (Cr,)
    w2: (C, Cr)  conv2 1x1 weight (squeezed), b2: (C,)
    """
    N, C, H, W = x.shape
    Cr = w1.shape[0]
    HW = H * W
    itemsize = x.dtype.itemsize

    block_bytes, vmem_limit = _budget()

    # VMEM footprint of one batch element's (C, HW) slab after (8, 128) tile padding.
    elem_bytes = _round_up(C, 8) * _round_up(HW, 128) * itemsize

    # Fuse as many batch elements per grid step as the budget allows, but keep >= 2
    # grid steps when N permits (shard across both v7x TensorCores; overlap the
    # output DMA of step i with the input DMA of step i+1 on every generation).
    min_steps = 2 if N >= 2 else 1
    tb = 1
    for d in sorted(_divisors(N), reverse=True):
        if d > _TB_CAP or N // d < min_steps:
            continue
        if d * elem_bytes <= block_bytes:
            tb = d
            break
    # TODO(synk): also tile the HW axis if a single (1, C, HW) slab ever exceeds the
    # block budget (never the case for LCNet SE shapes); for now just widen the limit.
    weight_bytes = (C * Cr * 2 + C + Cr) * jnp.dtype(w1.dtype).itemsize
    vmem_limit = max(vmem_limit, 4 * tb * elem_bytes + 2 * weight_bytes + (2 << 20))

    x3 = x.reshape(N, C, HW)          # free view: stays NCHW-native, no transpose
    b1c = b1.reshape(Cr, 1)
    b2c = b2.reshape(C, 1)

    cost = pl.CostEstimate(
        flops=int(3 * N * C * HW + 4 * N * C * Cr),
        transcendentals=0,
        bytes_accessed=int(2 * x.size * itemsize + 2 * weight_bytes),
    )

    out = pl.pallas_call(
        _se_kernel,
        out_shape=jax.ShapeDtypeStruct((N, C, HW), x.dtype),
        grid=(N // tb,),
        in_specs=[
            pl.BlockSpec((tb, C, HW), lambda i: (i, 0, 0)),
            pl.BlockSpec((Cr, C), lambda i: (0, 0)),
            pl.BlockSpec((Cr, 1), lambda i: (0, 0)),
            pl.BlockSpec((C, Cr), lambda i: (0, 0)),
            pl.BlockSpec((C, 1), lambda i: (0, 0)),
        ],
        out_specs=pl.BlockSpec((tb, C, HW), lambda i: (i, 0, 0)),
        compiler_params=pltpu.CompilerParams(
            dimension_semantics=("parallel",),
            vmem_limit_bytes=int(vmem_limit)),
        cost_estimate=cost,
    )(x3, w1, b1c, w2, b2c)

    return out.reshape(N, C, H, W)


def _se_reference(x, w1, b1, w2, b2):
    pooled = jnp.mean(x, axis=(2, 3))                                 # (N, C)
    h = jnp.maximum(pooled @ w1.T + b1, 0.0)                          # (N, Cr)
    s = jnp.clip((h @ w2.T + b2) * (1.0 / 6.0) + 0.5, 0.0, 1.0)       # (N, C)
    return x * s[:, :, None, None]


if __name__ == "__main__":
    key = jax.random.PRNGKey(0)
    # Tolerance covers MXU f32 accumulation-order differences vs the XLA reference.
    TOL = dict(atol=5e-3, rtol=5e-3)

    def run_case(N, C, H, W, key):
        Cr = max(C // 4, 1)
        kx, k1, k2, k3, k4, key = jax.random.split(key, 6)
        x = jax.random.normal(kx, (N, C, H, W), dtype=jnp.float32)
        w1 = jax.random.normal(k1, (Cr, C), dtype=jnp.float32) * 0.3
        b1 = jax.random.normal(k2, (Cr,), dtype=jnp.float32) * 0.1
        w2 = jax.random.normal(k3, (C, Cr), dtype=jnp.float32) * 0.3
        b2 = jax.random.normal(k4, (C,), dtype=jnp.float32) * 0.1
        out = jax.block_until_ready(se_module(x, w1, b1, w2, b2))
        ref = _se_reference(x, w1, b1, w2, b2)
        assert out.shape == x.shape
        assert jnp.allclose(out, ref, **TOL), f"mismatch vs reference at {(N, C, H, W)}"
        return key

    # SEModule(channel=4) demo shape (small C; HW a multiple of 128).
    key = run_case(2, 4, 16, 16, key)
    # Lane-aligned channel count as in real LCNet stages (HW=49 -> masked lane tail).
    key = run_case(2, 128, 7, 7, key)

    print("KERNEL_OK")
</pallas_src>

<mosaic_0001>
module attributes {stable_mosaic.version = 11 : i64} {
  func.func @_se_kernel(%arg0: i32, %arg1: memref<1x4x256xf32, #tpu.memory_space<vmem>>, %arg2: memref<1x4xf32, #tpu.memory_space<vmem>>, %arg3: memref<1x1xf32, #tpu.memory_space<vmem>>, %arg4: memref<4x1xf32, #tpu.memory_space<vmem>>, %arg5: memref<4x1xf32, #tpu.memory_space<vmem>>, %arg6: memref<1x4x256xf32, #tpu.memory_space<vmem>>) attributes {dimension_semantics = [#tpu.dimension_semantics<parallel>], iteration_bounds = array<i64: 2>, scalar_prefetch = 0 : i64, scratch_operands = 0 : i64, tpu.core_type = #tpu.core_type<tc>, window_params = [{transform_indices = @transform_0, window_bounds = array<i64: 1, 4, 256>}, {pipeline_mode = #tpu.pipeline_mode<synchronous>, transform_indices = @transform_1, window_bounds = array<i64: 1, 4>}, {pipeline_mode = #tpu.pipeline_mode<synchronous>, transform_indices = @transform_2, window_bounds = array<i64: 1, 1>}, {pipeline_mode = #tpu.pipeline_mode<synchronous>, transform_indices = @transform_3, window_bounds = array<i64: 4, 1>}, {pipeline_mode = #tpu.pipeline_mode<synchronous>, transform_indices = @transform_4, window_bounds = array<i64: 4, 1>}, {transform_indices = @transform_5, window_bounds = array<i64: 1, 4, 256>}]} {
    %c0 = arith.constant 0 : index
    %c0_0 = arith.constant 0 : index
    %c0_1 = arith.constant 0 : index
    %0 = vector.load %arg1[%c0, %c0_0, %c0_1] : memref<1x4x256xf32, #tpu.memory_space<vmem>>, vector<1x4x256xf32>
    %cst = arith.constant dense<0.000000e+00> : vector<1x4xf32>
    %1 = vector.multi_reduction <add>, %0, %cst [2] : vector<1x4x256xf32> to vector<1x4xf32>
    %2 = vector.shape_cast %1 : vector<1x4xf32> to vector<1x4x1xf32>
    %cst_2 = arith.constant 2.560000e+02 : f32
    %3 = vector.broadcast %cst_2 : f32 to vector<1x4x1xf32>
    %4 = arith.divf %2, %3 : vector<1x4x1xf32>
    %5 = vector.shape_cast %4 : vector<1x4x1xf32> to vector<4x1xf32>
    %c0_3 = arith.constant 0 : index
    %c0_4 = arith.constant 0 : index
    %6 = vector.load %arg2[%c0_3, %c0_4] : memref<1x4xf32, #tpu.memory_space<vmem>>, vector<1x4xf32>
    %cst_5 = arith.constant dense<0.000000e+00> : vector<1x1xf32>
    %7 = tpu.matmul %6, %5, %cst_5 {dimension_numbers = #tpu.dot_dimension_numbers<[1], [0], [0], [1], [0, 0, 1, 1], [], []>} : vector<1x4xf32>, vector<4x1xf32>, vector<1x1xf32> -> vector<1x1xf32>
    %c0_6 = arith.constant 0 : index
    %c0_7 = arith.constant 0 : index
    %8 = vector.load %arg3[%c0_6, %c0_7] : memref<1x1xf32, #tpu.memory_space<vmem>>, vector<1x1xf32>
    %9 = arith.addf %7, %8 : vector<1x1xf32>
    %cst_8 = arith.constant 0.000000e+00 : f32
    %10 = vector.broadcast %cst_8 : f32 to vector<1x1xf32>
    %11 = arith.maximumf %9, %10 : vector<1x1xf32>
    %c0_9 = arith.constant 0 : index
    %c0_10 = arith.constant 0 : index
    %12 = vector.load %arg4[%c0_9, %c0_10] : memref<4x1xf32, #tpu.memory_space<vmem>>, vector<4x1xf32>
    %cst_11 = arith.constant dense<0.000000e+00> : vector<4x1xf32>
    %13 = tpu.matmul %12, %11, %cst_11 {dimension_numbers = #tpu.dot_dimension_numbers<[1], [0], [0], [1], [0, 0, 1, 1], [], []>} : vector<4x1xf32>, vector<1x1xf32>, vector<4x1xf32> -> vector<4x1xf32>
    %c0_12 = arith.constant 0 : index
    %c0_13 = arith.constant 0 : index
    %14 = vector.load %arg5[%c0_12, %c0_13] : memref<4x1xf32, #tpu.memory_space<vmem>>, vector<4x1xf32>
    %15 = arith.addf %13, %14 : vector<4x1xf32>
    %cst_14 = arith.constant 0.166666672 : f32
    %16 = vector.broadcast %cst_14 : f32 to vector<4x1xf32>
    %17 = arith.mulf %15, %16 : vector<4x1xf32>
    %cst_15 = arith.constant 5.000000e-01 : f32
    %18 = vector.broadcast %cst_15 : f32 to vector<4x1xf32>
    %19 = arith.addf %17, %18 : vector<4x1xf32>
    %cst_16 = arith.constant 0.000000e+00 : f32
    %cst_17 = arith.constant 1.000000e+00 : f32
    %20 = vector.broadcast %cst_16 : f32 to vector<4x1xf32>
    %21 = arith.maximumf %20, %19 : vector<4x1xf32>
    %22 = vector.broadcast %cst_17 : f32 to vector<4x1xf32>
    %23 = arith.minimumf %22, %21 : vector<4x1xf32>
    %24 = vector.shape_cast %23 : vector<4x1xf32> to vector<1x4x1xf32>
    %25 = vector.broadcast %24 : vector<1x4x1xf32> to vector<1x4x256xf32>
    %26 = arith.mulf %0, %25 : vector<1x4x256xf32>
    %c0_18 = arith.constant 0 : index
    %c0_19 = arith.constant 0 : index
    %c0_20 = arith.constant 0 : index
    %27 = vector.load %arg6[%c0_18, %c0_19, %c0_20] : memref<1x4x256xf32, #tpu.memory_space<vmem>>, vector<1x4x256xf32>
    tpu.vector_store %arg6[%c0_18, %c0_19, %c0_20], %26 {strides = array<i32>} : memref<1x4x256xf32, #tpu.memory_space<vmem>>, vector<1x4x256xf32>,
    return
  }
  func.func @transform_0(%arg0: i32) -> (i32, i32, i32) {
    %c0_i32 = arith.constant 0 : i32
    %c0_i32_0 = arith.constant 0 : i32
    %c0_i32_1 = arith.constant 0 : i32
    return %arg0, %c0_i32, %c0_i32_0 : i32, i32, i32
  }
  func.func @transform_1(%arg0: i32) -> (i32, i32) {
    %c0_i32 = arith.constant 0 : i32
    %c0_i32_0 = arith.constant 0 : i32
    %c0_i32_1 = arith.constant 0 : i32
    return %c0_i32, %c0_i32_0 : i32, i32
  }
  func.func @transform_2(%arg0: i32) -> (i32, i32) {
    %c0_i32 = arith.constant 0 : i32
    %c0_i32_0 = arith.constant 0 : i32
    %c0_i32_1 = arith.constant 0 : i32
    return %c0_i32, %c0_i32_0 : i32, i32
  }
  func.func @transform_3(%arg0: i32) -> (i32, i32) {
    %c0_i32 = arith.constant 0 : i32
    %c0_i32_0 = arith.constant 0 : i32
    %c0_i32_1 = arith.constant 0 : i32
    return %c0_i32, %c0_i32_0 : i32, i32
  }
  func.func @transform_4(%arg0: i32) -> (i32, i32) {
    %c0_i32 = arith.constant 0 : i32
    %c0_i32_0 = arith.constant 0 : i32
    %c0_i32_1 = arith.constant 0 : i32
    return %c0_i32, %c0_i32_0 : i32, i32
  }
  func.func @transform_5(%arg0: i32) -> (i32, i32, i32) {
    %c0_i32 = arith.constant 0 : i32
    %c0_i32_0 = arith.constant 0 : i32
    %c0_i32_1 = arith.constant 0 : i32
    return %arg0, %c0_i32, %c0_i32_0 : i32, i32, i32
  }
}

</mosaic_0001>

<llo_original>
// kernel: tpu_custom_call.1
$region0: #{tpu_custom_call.1}
  #allocation0 [shape = 'u32[]', space=smem, size = 0x4, offset = 0x4, fixed_abs, tag = 'smem constant byte address 0x4 - core index']
  #allocation1 [shape = 'u32[144,128]{1,0:T(1,128)}', space=vmem, size = 0x12000, scoped, tag = 'internal scratch']
  #allocation2 [shape = 'f32[1,1]{1,0:T(1,128)S(1)}', space=vmem, size = 0x200, scoped, tag = 'scoped memory for tpu_custom_call.1']
  %s0 = inlined_call_operand.hbm [shape: f32[2,4,256], index: 0, kind: input, shape index: {}]
  %s1 = inlined_call_operand.vmem [shape: f32[1,4], index: 1, kind: input, shape index: {}]
  %s2 = inlined_call_operand.<no memory space> [shape: f32[1,1], index: 2, kind: input, shape index: {}]
  %s3 = inlined_call_operand.vmem [shape: f32[4,1], index: 3, kind: input, shape index: {}]
  %s4 = inlined_call_operand.vmem [shape: f32[4,1], index: 4, kind: input, shape index: {}]
  %s5 = inlined_call_operand.hbm [shape: f32[2,4,256], index: 5, kind: output, shape index: {}]
  %s6 = sld [smem:[#allocation0]]
  $region57: #{tpu_custom_call.1} parent=0
    _
  %s8 = ssub.s32 1, %s6
  %s9 = scalar_select 0, %s8, %s6
  %v10 = vstv %s2
  %11 = vst [vmem:[#allocation2] sm:$0x1] %v10
  $region1: #{tpu_custom_call.1} parent=0
    #allocation3 [shape = 'u8[8192]{0}', space=vmem, size = 0x2000, scoped, tag = 'input window, operand 0']
    #allocation4 [shape = 's32[2]{0}', space=sflag, size = 0x8, scoped, tag = 'scoped memory for tpu_custom_call.1']
    #allocation5 [shape = 's32[2]{0}', space=sflag, size = 0x8, scoped, tag = 'scoped memory for tpu_custom_call.1']
    #allocation6 [shape = 'u8[8192]{0}', space=vmem, size = 0x2000, scoped, tag = 'output window, operand 0']
    %12 = vsyncpa [#allocation4], 0
    %s13 = scalar_lea.sflag [#allocation4], 1
    %14 = vsyncpa %s13, 0
    %15 = vsyncpa [#allocation5], 0
    %s16 = scalar_lea.sflag [#allocation5], 1
    %17 = vsyncpa %s16, 0
    loop: start=0, step=1, limit=4
    $region2: #{tpu_custom_call.1} parent=1 // loop_pre_header
      _
    $region3: #{tpu_custom_call.1} parent=1 // loop_header
      %s19 = sphi 0, %s23
      %p20 = scmp.ge.s32.totalorder %s19, 4
      %s29 = sphi 0, %s31
      %s32 = sphi 0, %s29
      %s33 = sphi 0, %s32
      %s49 = sphi 0, %s33
      %s53 = sphi 0, %s53
      %s55 = sphi 0, %s53
      %s56 = sphi 0, %s55
      %s70 = sphi 0, %s56
      %s74 = sphi 0, %s74
      %s76 = sphi 0, %s74
      %s77 = sphi 0, %s76
      %s91 = sphi 0, %s77
      %s95 = sphi 0, %s95
      %s97 = sphi 0, %s95
      %s98 = sphi 0, %s97
      %s112 = sphi 0, %s98
      %s116 = sphi 0, %s116
      %s118 = sphi 0, %s116
      %s119 = sphi 0, %s118
      %s133 = sphi 0, %s119
      %s139 = sphi 0, %s141
      %s142 = sphi 0, %s139
      %s143 = sphi 0, %s142
      %s159 = sphi 0, %s143
    $region4: #{tpu_custom_call.1} parent=1 // loop_header_branch
      %22 = sbr.rel (%p20) target = $region8
    $region5: #{tpu_custom_call.1} parent=1 // loop_body
      %s24 = ssub.s32 %s19, 1
      %s25 = ssub.s32 %s19, 2
      %s26 = sadd.s32 %s19, 1
      %s27 = ssub.s32 %s19, %s26
      %p28 = scmp.eq.s32.totalorder %s27, 0
      %s30 = sadd.s32 %s29, 1
      %s31 = scalar_select %p28, %s29, %s30
      %p34 = pneg %p28
      %p35 = scmp.eq.s32.totalorder %s19, 1
      %p36 = por %p34, %p35
      %p37 = scmp.ne.s32.totalorder %s29, %s32
      %p38 = scmp.eq.s32.totalorder %s19, 0
      %p39 = por %p37, %p38
      %p40 = scmp.ne.s32.totalorder %s29, %s32
      %p41 = scmp.eq.s32.totalorder %s24, 1
      %p42 = por %p40, %p41
      %p43 = scmp.ne.s32.totalorder %s32, %s33
      %p44 = scmp.eq.s32.totalorder %s24, 0
      %p45 = por %p43, %p44
      %p46 = scmp.ne.s32.totalorder %s32, %s33
      %p47 = scmp.eq.s32.totalorder %s25, 1
      %p48 = por %p46, %p47
      %p50 = scmp.ne.s32.totalorder %s33, %s49
      %p51 = scmp.eq.s32.totalorder %s25, 0
      %p52 = por %p50, %p51
      %s54 = sadd.s32 %s53, 1
      %p57 = scmp.eq.s32.totalorder %s19, 1
      %p58 = scmp.ne.s32.totalorder %s53, %s55
      %p59 = scmp.eq.s32.totalorder %s19, 0
      %p60 = por %p58, %p59
      %p61 = scmp.ne.s32.totalorder %s53, %s55
      %p62 = scmp.eq.s32.totalorder %s24, 1
      %p63 = por %p61, %p62
      %p64 = scmp.ne.s32.totalorder %s55, %s56
      %p65 = scmp.eq.s32.totalorder %s24, 0
      %p66 = por %p64, %p65
      %p67 = scmp.ne.s32.totalorder %s55, %s56
      %p68 = scmp.eq.s32.totalorder %s25, 1
      %p69 = por %p67, %p68
      %p71 = scmp.ne.s32.totalorder %s56, %s70
      %p72 = scmp.eq.s32.totalorder %s25, 0
      %p73 = por %p71, %p72
      %s75 = sadd.s32 %s74, 1
      %p78 = scmp.eq.s32.totalorder %s19, 1
      %p79 = scmp.ne.s32.totalorder %s74, %s76
      %p80 = scmp.eq.s32.totalorder %s19, 0
      %p81 = por %p79, %p80
      %p82 = scmp.ne.s32.totalorder %s74, %s76
      %p83 = scmp.eq.s32.totalorder %s24, 1
      %p84 = por %p82, %p83
      %p85 = scmp.ne.s32.totalorder %s76, %s77
      %p86 = scmp.eq.s32.totalorder %s24, 0
      %p87 = por %p85, %p86
      %p88 = scmp.ne.s32.totalorder %s76, %s77
      %p89 = scmp.eq.s32.totalorder %s25, 1
      %p90 = por %p88, %p89
      %p92 = scmp.ne.s32.totalorder %s77, %s91
      %p93 = scmp.eq.s32.totalorder %s25, 0
      %p94 = por %p92, %p93
      %s96 = sadd.s32 %s95, 1
      %p99 = scmp.eq.s32.totalorder %s19, 1
      %p100 = scmp.ne.s32.totalorder %s95, %s97
      %p101 = scmp.eq.s32.totalorder %s19, 0
      %p102 = por %p100, %p101
      %p103 = scmp.ne.s32.totalorder %s95, %s97
      %p104 = scmp.eq.s32.totalorder %s24, 1
      %p105 = por %p103, %p104
      %p106 = scmp.ne.s32.totalorder %s97, %s98
      %p107 = scmp.eq.s32.totalorder %s24, 0
      %p108 = por %p106, %p107
      %p109 = scmp.ne.s32.totalorder %s97, %s98
      %p110 = scmp.eq.s32.totalorder %s25, 1
      %p111 = por %p109, %p110
      %p113 = scmp.ne.s32.totalorder %s98, %s112
      %p114 = scmp.eq.s32.totalorder %s25, 0
      %p115 = por %p113, %p114
      %s117 = sadd.s32 %s116, 1
      %p120 = scmp.eq.s32.totalorder %s19, 1
      %p121 = scmp.ne.s32.totalorder %s116, %s118
      %p122 = scmp.eq.s32.totalorder %s19, 0
      %p123 = por %p121, %p122
      %p124 = scmp.ne.s32.totalorder %s116, %s118
      %p125 = scmp.eq.s32.totalorder %s24, 1
      %p126 = por %p124, %p125
      %p127 = scmp.ne.s32.totalorder %s118, %s119
      %p128 = scmp.eq.s32.totalorder %s24, 0
      %p129 = por %p127, %p128
      %p130 = scmp.ne.s32.totalorder %s118, %s119
      %p131 = scmp.eq.s32.totalorder %s25, 1
      %p132 = por %p130, %p131
      %p134 = scmp.ne.s32.totalorder %s119, %s133
      %p135 = scmp.eq.s32.totalorder %s25, 0
      %p136 = por %p134, %p135
      %s137 = ssub.s32 %s19, %s26
      %p138 = scmp.eq.s32.totalorder %s137, 0
      %s140 = sadd.s32 %s139, 1
      %s141 = scalar_select %p138, %s139, %s140
      %p144 = pneg %p138
      %p145 = scmp.eq.s32.totalorder %s19, 1
      %p146 = por %p144, %p145
      %p147 = scmp.ne.s32.totalorder %s139, %s142
      %p148 = scmp.eq.s32.totalorder %s19, 0
      %p149 = por %p147, %p148
      %p150 = scmp.ne.s32.totalorder %s139, %s142
      %p151 = scmp.eq.s32.totalorder %s24, 1
      %p152 = por %p150, %p151
      %p153 = scmp.ne.s32.totalorder %s142, %s143
      %p154 = scmp.eq.s32.totalorder %s24, 0
      %p155 = por %p153, %p154
      %p156 = scmp.ne.s32.totalorder %s142, %s143
      %p157 = scmp.eq.s32.totalorder %s25, 1
      %p158 = por %p156, %p157
      %p160 = scmp.ne.s32.totalorder %s143, %s159
      %p161 = scmp.eq.s32.totalorder %s25, 0
      %p162 = por %p160, %p161
      %p163 = scmp.le.s32.totalorder 1, %s19
      %p164 = scmp.lt.s32.totalorder %s19, 3
      %p165 = pnand %p163, %p164
      %p166 = pneg %p165
      // Predicated region
      $region9: #{tpu_custom_call.1} parent=5 // pred_check
        _
      $region10: #{tpu_custom_call.1} parent=5 // pred_check_branch
        %168 = sbr.rel (%p165) target = $region12
      $region11: #{tpu_custom_call.1} parent=5 // pred_region
        %s169 = ssub.s32 %s19, 1
        // Predicated region
        $region13: #{tpu_custom_call.1} parent=11 // pred_check
          %p170 = pneg %p66
        $region14: #{tpu_custom_call.1} parent=11 // pred_check_branch
          %172 = sbr.rel (%p170) target = $region16
        $region15: #{tpu_custom_call.1} parent=11 // pred_region
          _
        $region16: #{tpu_custom_call.1} parent=11 // pred_fallthru
          _
        // Predicated region
        $region17: #{tpu_custom_call.1} parent=11 // pred_check
          %p173 = pneg %p87
        $region18: #{tpu_custom_call.1} parent=11 // pred_check_branch
          %175 = sbr.rel (%p173) target = $region20
        $region19: #{tpu_custom_call.1} parent=11 // pred_region
          _
        $region20: #{tpu_custom_call.1} parent=11 // pred_fallthru
          _
        // Predicated region
        $region21: #{tpu_custom_call.1} parent=11 // pred_check
          %p176 = pneg %p108
        $region22: #{tpu_custom_call.1} parent=11 // pred_check_branch
          %178 = sbr.rel (%p176) target = $region24
        $region23: #{tpu_custom_call.1} parent=11 // pred_region
          _
        $region24: #{tpu_custom_call.1} parent=11 // pred_fallthru
          _
        // Predicated region
        $region25: #{tpu_custom_call.1} parent=11 // pred_check
          %p179 = pneg %p129
        $region26: #{tpu_custom_call.1} parent=11 // pred_check_branch
          %181 = sbr.rel (%p179) target = $region28
        $region27: #{tpu_custom_call.1} parent=11 // pred_region
          _
        $region28: #{tpu_custom_call.1} parent=11 // pred_fallthru
          _
      $region12: #{tpu_custom_call.1} parent=5 // pred_fallthru
        _
      %p182 = scmp.lt.s32.totalorder %s19, 2
      // Predicated region
      $region29: #{tpu_custom_call.1} parent=5 // pred_check
        %p183 = pneg %p182
      $region30: #{tpu_custom_call.1} parent=5 // pred_check_branch
        %185 = sbr.rel (%p183) target = $region32
      $region31: #{tpu_custom_call.1} parent=5 // pred_region
        // Predicated region
        $region33: #{tpu_custom_call.1} parent=31 // pred_check
          %p186 = pneg %p39
        $region34: #{tpu_custom_call.1} parent=31 // pred_check_branch
          %188 = sbr.rel (%p186) target = $region36
        $region35: #{tpu_custom_call.1} parent=31 // pred_region
          %s189 = sand.u32 %s29, 1
          %s190 = scalar_lea.sflag [#allocation4], %s189
          %s191 = sand.u32 %s29, 1
          %s192 = smul.addr %s191, 8
          %s193 = scalar_lea.vmem [#allocation3], %s192
          %s195 = ssub.s32 128, 128
          %196 = vsyncadd %s190, %s195
          %s197 = smul.addr %s19, 2
          %s198 = smul.addr %s197, 64
          %s199 = scalar_lea.hbm %s0, %s198
          %s201 = sshll.u32 %s193, 4
          %s202 = int_to_ptr.vmem [resolvable:$true] %s201
          %204 = dma.hbm_to_vmem [thread:$0]  %s199, 128, %s202, %s190
        $region36: #{tpu_custom_call.1} parent=31 // pred_fallthru
          _
      $region32: #{tpu_custom_call.1} parent=5 // pred_fallthru
        _
      %p205 = scmp.le.s32.totalorder 1, %s19
      %p206 = scmp.lt.s32.totalorder %s19, 3
      %p207 = pnand %p205, %p206
      %p208 = pneg %p207
      // Predicated region
      $region37: #{tpu_custom_call.1} parent=5 // pred_check
        _
      $region38: #{tpu_custom_call.1} parent=5 // pred_check_branch
        %210 = sbr.rel (%p207) target = $region40
      $region39: #{tpu_custom_call.1} parent=5 // pred_region
        %s211 = ssub.s32 %s19, 1
        %s212 = sand.u32 %s32, 1
        %s213 = scalar_lea.sflag [#allocation4], %s212
        %s214 = sand.u32 %s32, 1
        %s215 = smul.addr %s214, 8
        %s216 = scalar_lea.vmem [#allocation3], %s215
        // Predicated region
        $region41: #{tpu_custom_call.1} parent=39 // pred_check
          %p217 = pneg %p45
        $region42: #{tpu_custom_call.1} parent=39 // pred_check_branch
          %219 = sbr.rel (%p217) target = $region44
        $region43: #{tpu_custom_call.1} parent=39 // pred_region
          %220 = dma.done %s213, 128
        $region44: #{tpu_custom_call.1} parent=39 // pred_fallthru
          _
        %s221 = sand.u32 %s32, 1
        %s222 = scalar_lea.sflag [#allocation4], %s221
        %s223 = sand.u32 %s32, 1
        %s224 = smul.addr %s223, 8
        %s225 = scalar_lea.vmem [#allocation3], %s224
        %p226 = pneg %p45
        %p227 = pneg %p42
        %p228 = pneg %p66
        %p229 = pneg %p63
        %p230 = pneg %p87
        %p231 = pneg %p84
        %p232 = pneg %p108
        %p233 = pneg %p105
        %p234 = pneg %p129
        %p235 = pneg %p126
        %p236 = pneg %p155
        %p237 = pneg %p152
        %s238 = sand.u32 %s142, 1
        %s239 = scalar_lea.sflag [#allocation5], %s238
        %s240 = sand.u32 %s142, 1
        %s241 = smul.addr %s240, 8
        %s242 = scalar_lea.vmem [#allocation6], %s241
        %v243 = vld [vmem:[%s216] sm:$0xff]
        %v245 = vcombine.high %v243, %v243
        %vm247 = vcmask 1043456
        %v248 = vsel %vm247, %v243, 0.0
        %v249 = vsel %vm247, %v245, 0.0
        %v250 = vadd.f32 %v248, %v249
        %251 = vadd.xlane.f32.xlu0 %v250
        %v252 = vpop.xlane.xlu0 %251
        %v253 = vrcp.pop 256.0
        %v254 = vmul.f32 %v252, %v253
        %v255 = vld [vmem:[%s1] sm:$0x1]
        %v256 = vld [vmem:[#allocation2] sm:$0x1]
        %vm257 = vcmask 31744
        %v259 = vsel %vm257, %v255, 0
        %v262 = vsel %vm247, %v254, 0
        %264 = vmatprep.subr.mxu0 0.0
        %265 = vmatpush1.msra.mxu0 %v262
        %266 = vmatprep.subr.mxu0 0.0
        %267 = vmatpush1.msra.mxu0 0.0
        %268 = vmatprep.subr.mxu0 0.0
        %269 = vmatpush1.msra.mxu0 0.0
        %270 = vmatprep.subr.mxu0 0.0
        %271 = vmatpush1.msra.mxu0 0.0
        %272 = vmatprep.subr.mxu0 0.0
        %273 = vmatpush1.msra.mxu0 0.0
        %274 = vmatprep.subr.mxu0 0.0
        %275 = vmatpush1.msra.mxu0 0.0
        %276 = vmatprep.subr.mxu0 0.0
        %277 = vmatpush1.msra.mxu0 0.0
        %278 = vmatprep.subr.mxu0 0.0
        %279 = vmatpush1.msra.mxu0 0.0
        %280 = vmatprep.subr.mxu0 0.0
        %281 = vmatpush1.msra.mxu0 0.0
        %282 = vmatprep.subr.mxu0 0.0
        %283 = vmatpush1.msra.mxu0 0.0
        %284 = vmatprep.subr.mxu0 0.0
        %285 = vmatpush1.msra.mxu0 0.0
        %286 = vmatprep.subr.mxu0 0.0
        %287 = vmatpush1.msra.mxu0 0.0
        %288 = vmatprep.subr.mxu0 0.0
        %289 = vmatpush1.msra.mxu0 0.0
        %290 = vmatprep.subr.mxu0 0.0
        %291 = vmatpush1.msra.mxu0 0.0
        %292 = vmatprep.subr.mxu0 0.0
        %293 = vmatpush1.msra.mxu0 0.0
        %294 = vmatprep.subr.mxu0 0.0
        %295 = vmatpush1.msra.mxu0 0.0
        %296 = vmatprep.subr.mxu0 0.0
        %297 = vmatpush1.msra.mxu0 0.0
        %298 = vmatprep.subr.mxu0 0.0
        %299 = vmatpush1.msra.mxu0 0.0
        %300 = vmatprep.subr.mxu0 0.0
        %301 = vmatpush1.msra.mxu0 0.0
        %302 = vmatprep.subr.mxu0 0.0
        %303 = vmatpush1.msra.mxu0 0.0
        %304 = vmatprep.subr.mxu0 0.0
        %305 = vmatpush1.msra.mxu0 0.0
        %306 = vmatprep.subr.mxu0 0.0
        %307 = vmatpush1.msra.mxu0 0.0
        %308 = vmatprep.subr.mxu0 0.0
        %309 = vmatpush1.msra.mxu0 0.0
        %310 = vmatprep.subr.mxu0 0.0
        %311 = vmatpush1.msra.mxu0 0.0
        %312 = vmatprep.subr.mxu0 0.0
        %313 = vmatpush1.msra.mxu0 0.0
        %314 = vmatprep.subr.mxu0 0.0
        %315 = vmatpush1.msra.mxu0 0.0
        %316 = vmatprep.subr.mxu0 0.0
        %317 = vmatpush1.msra.mxu0 0.0
        %318 = vmatprep.subr.mxu0 0.0
        %319 = vmatpush1.msra.mxu0 0.0
        %320 = vmatprep.subr.mxu0 0.0
        %321 = vmatpush1.msra.mxu0 0.0
        %322 = vmatprep.subr.mxu0 0.0
        %323 = vmatpush1.msra.mxu0 0.0
        %324 = vmatprep.subr.mxu0 0.0
        %325 = vmatpush1.msra.mxu0 0.0
        %326 = vmatprep.subr.mxu0 0.0
        %327 = vmatpush1.msra.mxu0 0.0
        %328 = vmatprep.mubr.f32.mxu0 0.0
        %329 = vmatmul.mubr.f32.gmra.mrb[0].mxu0 %v259
        %v330 = vpop.f32.mrb[0].mxu0
        %v331 = vadd.f32 %v256, %v330
        %v332 = vpop.f32.mrb[0].mxu0
        %333 = vdwg.mxu0
        %v334 = vmax.f32 %v331, 0.0
        %v335 = vld [vmem:[%s3] sm:$0xf]
        %v336 = vld [vmem:[%s4] sm:$0xf]
        %vm337 = vcmask 7168
        %v339 = vsel %vm337, %v335, 0
        %vm341 = vcmask 1040384
        %v343 = vsel %vm341, %v334, 0
        %345 = vmatprep.subr.mxu0 0.0
        %346 = vmatpush1.msra.mxu0 %v343
        %347 = vmatprep.subr.mxu0 0.0
        %348 = vmatpush1.msra.mxu0 0.0
        %349 = vmatprep.subr.mxu0 0.0
        %350 = vmatpush1.msra.mxu0 0.0
        %351 = vmatprep.subr.mxu0 0.0
        %352 = vmatpush1.msra.mxu0 0.0
        %353 = vmatprep.subr.mxu0 0.0
        %354 = vmatpush1.msra.mxu0 0.0
        %355 = vmatprep.subr.mxu0 0.0
        %356 = vmatpush1.msra.mxu0 0.0
        %357 = vmatprep.subr.mxu0 0.0
        %358 = vmatpush1.msra.mxu0 0.0
        %359 = vmatprep.subr.mxu0 0.0
        %360 = vmatpush1.msra.mxu0 0.0
        %361 = vmatprep.subr.mxu0 0.0
        %362 = vmatpush1.msra.mxu0 0.0
        %363 = vmatprep.subr.mxu0 0.0
        %364 = vmatpush1.msra.mxu0 0.0
        %365 = vmatprep.subr.mxu0 0.0
        %366 = vmatpush1.msra.mxu0 0.0
        %367 = vmatprep.subr.mxu0 0.0
        %368 = vmatpush1.msra.mxu0 0.0
        %369 = vmatprep.subr.mxu0 0.0
        %370 = vmatpush1.msra.mxu0 0.0
        %371 = vmatprep.subr.mxu0 0.0
        %372 = vmatpush1.msra.mxu0 0.0
        %373 = vmatprep.subr.mxu0 0.0
        %374 = vmatpush1.msra.mxu0 0.0
        %375 = vmatprep.subr.mxu0 0.0
        %376 = vmatpush1.msra.mxu0 0.0
        %377 = vmatprep.subr.mxu0 0.0
        %378 = vmatpush1.msra.mxu0 0.0
        %379 = vmatprep.subr.mxu0 0.0
        %380 = vmatpush1.msra.mxu0 0.0
        %381 = vmatprep.subr.mxu0 0.0
        %382 = vmatpush1.msra.mxu0 0.0
        %383 = vmatprep.subr.mxu0 0.0
        %384 = vmatpush1.msra.mxu0 0.0
        %385 = vmatprep.subr.mxu0 0.0
        %386 = vmatpush1.msra.mxu0 0.0
        %387 = vmatprep.subr.mxu0 0.0
        %388 = vmatpush1.msra.mxu0 0.0
        %389 = vmatprep.subr.mxu0 0.0
        %390 = vmatpush1.msra.mxu0 0.0
        %391 = vmatprep.subr.mxu0 0.0
        %392 = vmatpush1.msra.mxu0 0.0
        %393 = vmatprep.subr.mxu0 0.0
        %394 = vmatpush1.msra.mxu0 0.0
        %395 = vmatprep.subr.mxu0 0.0
        %396 = vmatpush1.msra.mxu0 0.0
        %397 = vmatprep.subr.mxu0 0.0
        %398 = vmatpush1.msra.mxu0 0.0
        %399 = vmatprep.subr.mxu0 0.0
        %400 = vmatpush1.msra.mxu0 0.0
        %401 = vmatprep.subr.mxu0 0.0
        %402 = vmatpush1.msra.mxu0 0.0
        %403 = vmatprep.subr.mxu0 0.0
        %404 = vmatpush1.msra.mxu0 0.0
        %405 = vmatprep.subr.mxu0 0.0
        %406 = vmatpush1.msra.mxu0 0.0
        %407 = vmatprep.subr.mxu0 0.0
        %408 = vmatpush1.msra.mxu0 0.0
        %409 = vmatprep.mubr.f32.mxu0 0.0
        %410 = vmatmul.mubr.f32.gmra.mrb[0].mxu0 %v339
        %v411 = vpop.f32.mrb[0].mxu0
        %v412 = vadd.f32 %v336, %v411
        %v413 = vpop.f32.mrb[0].mxu0
        %414 = vdwg.mxu0
        %v415 = vmul.f32 %v412, 0.16666667
        %v416 = vadd.f32 %v415, 0.5
        %v417 = vmax.f32 %v416, 0.0
        %v418 = vmin.f32 %v417, 1.0
        %420 = vset.pattern.permute.xlu0 0
        %421 = vperm.xlu0 %420, %v418
        %v422 = vpop.permute.xlu0 %421
        %v424 = vunpack.c.l.s4 839922192
        %v425 = vunpack.c.0.s8 %v424
        %v426 = vlaneseq
        %v427 = vshrl.u32 %v426, 7
        %v428 = vsub.s32 %v425, %v427
        %v429 = vrot.slane %v422, %v428
        %v431 = vmul.f32 %v243, %v429
        %432 = vst [vmem:[%s242] sm:$0xff] %v431
        %s433 = sand.u32 %s142, 1
        %s434 = scalar_lea.sflag [#allocation5], %s433
        %s435 = sand.u32 %s142, 1
        %s436 = smul.addr %s435, 8
        %s437 = scalar_lea.vmem [#allocation6], %s436
        // Predicated region
        $region45: #{tpu_custom_call.1} parent=39 // pred_check
          %p438 = pneg %p152
        $region46: #{tpu_custom_call.1} parent=39 // pred_check_branch
          %440 = sbr.rel (%p438) target = $region48
        $region47: #{tpu_custom_call.1} parent=39 // pred_region
          %s442 = ssub.s32 128, 128
          %443 = vsyncadd %s434, %s442
          %s444 = smul.addr %s24, 2
          %s445 = smul.addr %s444, 64
          %s446 = scalar_lea.hbm %s5, %s445
          %s448 = sshll.u32 %s437, 4
          %s449 = int_to_ptr.vmem [resolvable:$true] %s448
          %451 = dma.vmem_to_hbm [thread:$0]  %s449, 128, %s446, %s434
        $region48: #{tpu_custom_call.1} parent=39 // pred_fallthru
          _
      $region40: #{tpu_custom_call.1} parent=5 // pred_fallthru
        _
      %p452 = scmp.le.s32.totalorder 2, %s19
      // Predicated region
      $region49: #{tpu_custom_call.1} parent=5 // pred_check
        %p453 = pneg %p452
      $region50: #{tpu_custom_call.1} parent=5 // pred_check_branch
        %455 = sbr.rel (%p453) target = $region52
      $region51: #{tpu_custom_call.1} parent=5 // pred_region
        %s456 = ssub.s32 %s19, 2
        // Predicated region
        $region53: #{tpu_custom_call.1} parent=51 // pred_check
          %p457 = pneg %p158
        $region54: #{tpu_custom_call.1} parent=51 // pred_check_branch
          %459 = sbr.rel (%p457) target = $region56
        $region55: #{tpu_custom_call.1} parent=51 // pred_region
          %s460 = sand.u32 %s143, 1
          %s461 = scalar_lea.sflag [#allocation5], %s460
          %s462 = sand.u32 %s143, 1
          %s463 = smul.addr %s462, 8
          %s464 = scalar_lea.vmem [#allocation6], %s463
          %465 = dma.done %s461, 128
        $region56: #{tpu_custom_call.1} parent=51 // pred_fallthru
          _
      $region52: #{tpu_custom_call.1} parent=5 // pred_fallthru
        _
    $region6: #{tpu_custom_call.1} parent=1 // loop_footer
      %s23 = sadd.s32 1, %s19
    $region7: #{tpu_custom_call.1} parent=1 // loop_footer_branch
      %18 = sbr.rel target = $region3
    $region8: #{tpu_custom_call.1} parent=1 // loop_exit
      _
    %466 = vsyncpa [#allocation4], 1
    %s467 = scalar_lea.sflag [#allocation4], 1
    %468 = vsyncpa %s467, 1
    %469 = vsyncpa [#allocation5], 1
    %s470 = scalar_lea.sflag [#allocation5], 1
    %471 = vsyncpa %s470, 1

</llo_original>
